<compile_context>
chip_gen: v6e
topology: v6e:2x2x1
jax: 0.10.0
libtpu: 0.0.40
codegen_flags: <defaults>
</compile_context>

<pallas_src>
import functools

import jax
import jax.numpy as jnp
from jax.experimental import pallas as pl
from jax.experimental.pallas import tpu as pltpu


LANE = 128          # TPU lane width (last-dim alignment target)
SUBLANE = 8         # f32 sublane count
MAX_BATCH_TILE = 512  # single grid step for any B <= 512


def _round_up(n, m):
    return ((n + m - 1) // m) * m


def dqn_kernel(x_ref, w1_ref, b1_ref, w2_ref, b2_ref, o_ref):
    """One batch tile: fc1 (MXU, K=2) + bias + ReLU + fc2 (MXU) + bias."""
    x = x_ref[...]                                            # [TB, in_states] f32

    # fc1 on the MXU: [TB, in_states] @ [in_states, H_PAD] -> [TB, H_PAD]
    h = jnp.dot(x, w1_ref[...], preferred_element_type=jnp.float32)
    h = jnp.maximum(h + b1_ref[...], 0.0)                     # bias + ReLU (VPU)

    # fc2 on the MXU: [TB, H_PAD] @ [H_PAD, O_PAD] — lane-dense output store.
    out = jnp.dot(h, w2_ref[...], preferred_element_type=jnp.float32)
    o_ref[...] = (out + b2_ref[...]).astype(o_ref.dtype)


def prepare_params(w1, b1, w2, b2):
    """One-time parameter prep (hoisted out of the per-forward hot path):
    transpose PyTorch [out_features, in_features] weights to [in, out] and
    zero-pad hidden / output feature axes up to the 128-lane boundary."""
    h1, in_states = w1.shape
    out_actions = w2.shape[0]
    h_pad = _round_up(h1, LANE)
    o_pad = _round_up(out_actions, LANE)

    w1_p = jnp.zeros((in_states, h_pad), jnp.float32).at[:, :h1].set(w1.T)
    b1_p = jnp.zeros((1, h_pad), jnp.float32).at[0, :h1].set(b1)
    w2_p = jnp.zeros((h_pad, o_pad), jnp.float32).at[:h1, :out_actions].set(w2.T)
    b2_p = jnp.zeros((1, o_pad), jnp.float32).at[0, :out_actions].set(b2)
    return w1_p, b1_p, w2_p, b2_p, out_actions


def _batch_tiling(B):
    """Adaptive batch tiling: one grid step for B <= MAX_BATCH_TILE,
    otherwise MAX_BATCH_TILE-row tiles (grid count >= 2, megacore-shardable)."""
    b_min = _round_up(max(B, SUBLANE), SUBLANE)
    if b_min <= MAX_BATCH_TILE:
        return b_min, b_min            # (b_pad, tile) -> grid of 1
    b_pad = _round_up(B, MAX_BATCH_TILE)
    return b_pad, MAX_BATCH_TILE


@functools.partial(jax.jit, static_argnames=("out_actions",))
def dqn_forward(x, w1_p, b1_p, w2_p, b2_p, *, out_actions):
    """x: [B, in_states] f32; params already prepared by prepare_params()."""
    B, in_states = x.shape
    h_pad = w1_p.shape[1]
    o_pad = w2_p.shape[1]

    b_pad, tb = _batch_tiling(B)
    if b_pad != B:
        x = jnp.pad(x, ((0, b_pad - B), (0, 0)))
    grid = b_pad // tb

    cost = pl.CostEstimate(
        flops=2 * b_pad * h_pad * (in_states + o_pad),
        transcendentals=0,
        bytes_accessed=4 * (b_pad * in_states          # x
                            + in_states * h_pad + h_pad  # w1, b1
                            + h_pad * o_pad + o_pad      # w2, b2
                            + b_pad * o_pad),            # out
    )

    out_padded = pl.pallas_call(
        dqn_kernel,
        out_shape=jax.ShapeDtypeStruct((b_pad, o_pad), x.dtype),
        grid=(grid,),
        in_specs=[
            pl.BlockSpec((tb, in_states), lambda i: (i, 0)),
            pl.BlockSpec((in_states, h_pad), lambda i: (0, 0)),
            pl.BlockSpec((1, h_pad), lambda i: (0, 0)),
            pl.BlockSpec((h_pad, o_pad), lambda i: (0, 0)),
            pl.BlockSpec((1, o_pad), lambda i: (0, 0)),
        ],
        out_specs=pl.BlockSpec((tb, o_pad), lambda i: (i, 0)),
        compiler_params=pltpu.CompilerParams(
            dimension_semantics=("parallel",)),
        cost_estimate=cost,
    )(x, w1_p, b1_p, w2_p, b2_p)

    # Strip batch padding and lane padding (cheap XLA slice, fused under jit).
    # TODO(synk): if the consumer is greedy action selection, fuse the per-row
    # argmax into the kernel instead of emitting 128 padded Q columns.
    return out_padded[:B, :out_actions]


def dqn_reference(x, w1, b1, w2, b2):
    h = jnp.maximum(x @ w1.T + b1, 0.0)
    return h @ w2.T + b2


if __name__ == "__main__":
    # MountainCar-Discrete sizes: in_states=2, hidden=32, out_actions=3.
    # A replay-buffer minibatch of 64 states -> single grid step with the
    # adaptive batch tile.
    B, in_states, h1_nodes, out_actions = 64, 2, 32, 3

    key = jax.random.PRNGKey(0)
    kx, k1, k2, k3, k4 = jax.random.split(key, 5)

    x = jax.random.normal(kx, (B, in_states), dtype=jnp.float32)
    # Deterministic init, PyTorch nn.Linear parameter shapes ([out, in]).
    w1 = jax.random.normal(k1, (h1_nodes, in_states), dtype=jnp.float32) * 0.5
    b1 = jax.random.normal(k2, (h1_nodes,), dtype=jnp.float32) * 0.1
    w2 = jax.random.normal(k3, (out_actions, h1_nodes), dtype=jnp.float32) * 0.2
    b2 = jax.random.normal(k4, (out_actions,), dtype=jnp.float32) * 0.1

    # One-time parameter prep (transpose + lane padding), outside the hot path.
    w1_p, b1_p, w2_p, b2_p, n_act = prepare_params(w1, b1, w2, b2)
    w1_p, b1_p, w2_p, b2_p = jax.block_until_ready((w1_p, b1_p, w2_p, b2_p))

    out = dqn_forward(x, w1_p, b1_p, w2_p, b2_p, out_actions=n_act)
    out = jax.block_until_ready(out)

    ref = dqn_reference(x, w1, b1, w2, b2)
    assert out.shape == (B, out_actions)
    assert jnp.allclose(out, ref, atol=1e-5, rtol=1e-5)

    print("KERNEL_OK")
</pallas_src>

<mosaic_0001>
module attributes {stable_mosaic.version = 11 : i64} {
  func.func @dqn_kernel(%arg0: i32, %arg1: memref<64x2xf32, #tpu.memory_space<vmem>>, %arg2: memref<2x128xf32, #tpu.memory_space<vmem>>, %arg3: memref<1x128xf32, #tpu.memory_space<vmem>>, %arg4: memref<128x128xf32, #tpu.memory_space<vmem>>, %arg5: memref<1x128xf32, #tpu.memory_space<vmem>>, %arg6: memref<64x128xf32, #tpu.memory_space<vmem>>) attributes {dimension_semantics = [#tpu.dimension_semantics<parallel>], iteration_bounds = array<i64: 1>, scalar_prefetch = 0 : i64, scratch_operands = 0 : i64, tpu.core_type = #tpu.core_type<tc>, window_params = [{transform_indices = @transform_0, window_bounds = array<i64: 64, 2>}, {pipeline_mode = #tpu.pipeline_mode<synchronous>, transform_indices = @transform_1, window_bounds = array<i64: 2, 128>}, {pipeline_mode = #tpu.pipeline_mode<synchronous>, transform_indices = @transform_2, window_bounds = array<i64: 1, 128>}, {pipeline_mode = #tpu.pipeline_mode<synchronous>, transform_indices = @transform_3, window_bounds = array<i64: 128, 128>}, {pipeline_mode = #tpu.pipeline_mode<synchronous>, transform_indices = @transform_4, window_bounds = array<i64: 1, 128>}, {transform_indices = @transform_5, window_bounds = array<i64: 64, 128>}]} {
    %c0 = arith.constant 0 : index
    %c0_0 = arith.constant 0 : index
    %0 = vector.load %arg1[%c0, %c0_0] : memref<64x2xf32, #tpu.memory_space<vmem>>, vector<64x2xf32>
    %c0_1 = arith.constant 0 : index
    %c0_2 = arith.constant 0 : index
    %1 = vector.load %arg2[%c0_1, %c0_2] : memref<2x128xf32, #tpu.memory_space<vmem>>, vector<2x128xf32>
    %cst = arith.constant dense<0.000000e+00> : vector<64x128xf32>
    %2 = tpu.matmul %0, %1, %cst {dimension_numbers = #tpu.dot_dimension_numbers<[1], [0], [0], [1], [0, 0, 1, 1], [], []>} : vector<64x2xf32>, vector<2x128xf32>, vector<64x128xf32> -> vector<64x128xf32>
    %c0_3 = arith.constant 0 : index
    %c0_4 = arith.constant 0 : index
    %3 = vector.load %arg3[%c0_3, %c0_4] : memref<1x128xf32, #tpu.memory_space<vmem>>, vector<1x128xf32>
    %4 = vector.broadcast %3 : vector<1x128xf32> to vector<64x128xf32>
    %5 = arith.addf %2, %4 : vector<64x128xf32>
    %cst_5 = arith.constant 0.000000e+00 : f32
    %6 = vector.broadcast %cst_5 : f32 to vector<64x128xf32>
    %7 = arith.maximumf %5, %6 : vector<64x128xf32>
    %c0_6 = arith.constant 0 : index
    %c0_7 = arith.constant 0 : index
    %8 = vector.load %arg4[%c0_6, %c0_7] : memref<128x128xf32, #tpu.memory_space<vmem>>, vector<128x128xf32>
    %cst_8 = arith.constant dense<0.000000e+00> : vector<64x128xf32>
    %9 = tpu.matmul %7, %8, %cst_8 {dimension_numbers = #tpu.dot_dimension_numbers<[1], [0], [0], [1], [0, 0, 1, 1], [], []>} : vector<64x128xf32>, vector<128x128xf32>, vector<64x128xf32> -> vector<64x128xf32>
    %c0_9 = arith.constant 0 : index
    %c0_10 = arith.constant 0 : index
    %10 = vector.load %arg5[%c0_9, %c0_10] : memref<1x128xf32, #tpu.memory_space<vmem>>, vector<1x128xf32>
    %11 = vector.broadcast %10 : vector<1x128xf32> to vector<64x128xf32>
    %12 = arith.addf %9, %11 : vector<64x128xf32>
    %c0_11 = arith.constant 0 : index
    %c0_12 = arith.constant 0 : index
    %13 = vector.load %arg6[%c0_11, %c0_12] : memref<64x128xf32, #tpu.memory_space<vmem>>, vector<64x128xf32>
    tpu.vector_store %arg6[%c0_11, %c0_12], %12 {strides = array<i32>} : memref<64x128xf32, #tpu.memory_space<vmem>>, vector<64x128xf32>,
    return
  }
  func.func @transform_0(%arg0: i32) -> (i32, i32) {
    %c0_i32 = arith.constant 0 : i32
    %c0_i32_0 = arith.constant 0 : i32
    return %arg0, %c0_i32 : i32, i32
  }
  func.func @transform_1(%arg0: i32) -> (i32, i32) {
    %c0_i32 = arith.constant 0 : i32
    %c0_i32_0 = arith.constant 0 : i32
    %c0_i32_1 = arith.constant 0 : i32
    return %c0_i32, %c0_i32_0 : i32, i32
  }
  func.func @transform_2(%arg0: i32) -> (i32, i32) {
    %c0_i32 = arith.constant 0 : i32
    %c0_i32_0 = arith.constant 0 : i32
    %c0_i32_1 = arith.constant 0 : i32
    return %c0_i32, %c0_i32_0 : i32, i32
  }
  func.func @transform_3(%arg0: i32) -> (i32, i32) {
    %c0_i32 = arith.constant 0 : i32
    %c0_i32_0 = arith.constant 0 : i32
    %c0_i32_1 = arith.constant 0 : i32
    return %c0_i32, %c0_i32_0 : i32, i32
  }
  func.func @transform_4(%arg0: i32) -> (i32, i32) {
    %c0_i32 = arith.constant 0 : i32
    %c0_i32_0 = arith.constant 0 : i32
    %c0_i32_1 = arith.constant 0 : i32
    return %c0_i32, %c0_i32_0 : i32, i32
  }
  func.func @transform_5(%arg0: i32) -> (i32, i32) {
    %c0_i32 = arith.constant 0 : i32
    %c0_i32_0 = arith.constant 0 : i32
    return %arg0, %c0_i32 : i32, i32
  }
}

</mosaic_0001>

<llo_original>
// kernel: dqn_forward.1
$region0: #{dqn_forward.1}
  #allocation0 [shape = 'u32[]', space=smem, size = 0x4, offset = 0x4, fixed_abs, tag = 'smem constant byte address 0x4 - core index']
  #allocation1 [shape = 'u32[144,128]{1,0:T(1,128)}', space=vmem, size = 0x12000, scoped, tag = 'internal scratch']
  %s0 = inlined_call_operand.vmem [shape: f32[64,2], index: 0, kind: input, shape index: {}]
  %s1 = inlined_call_operand.vmem [shape: f32[2,128], index: 1, kind: input, shape index: {}]
  %s2 = inlined_call_operand.vmem [shape: f32[1,128], index: 2, kind: input, shape index: {}]
  %s3 = inlined_call_operand.hbm [shape: f32[128,128], index: 3, kind: input, shape index: {}]
  %s4 = inlined_call_operand.vmem [shape: f32[1,128], index: 4, kind: input, shape index: {}]
  %s5 = inlined_call_operand.vmem [shape: f32[64,128], index: 5, kind: output, shape index: {}]
  %s6 = sld [smem:[#allocation0]]
  $region34: #{dqn_forward.1} parent=0
    _
  %s8 = ssub.s32 1, %s6
  %s9 = scalar_select 0, %s8, %s6
  $region1: #{dqn_forward.1} parent=0
    #allocation2 [shape = 'u8[65536]{0}', space=vmem, size = 0x10000, scoped, tag = 'input window, operand 3, single buffered']
    #allocation3 [shape = 's32[1]{0}', space=sflag, size = 0x4, scoped, tag = 'scoped memory for dqn_forward.1']
    %10 = vsyncpa [#allocation3], 0
    // Predicated region
    $region2: #{dqn_forward.1} parent=1 // pred_check
      _
    $region3: #{dqn_forward.1} parent=1 // pred_check_branch
      %12 = sbr.rel (0) target = $region5
    $region4: #{dqn_forward.1} parent=1 // pred_region
      _
    $region5: #{dqn_forward.1} parent=1 // pred_fallthru
      _
    // Predicated region
    $region6: #{dqn_forward.1} parent=1 // pred_check
      _
    $region7: #{dqn_forward.1} parent=1 // pred_check_branch
      %14 = sbr.rel (0) target = $region9
    $region8: #{dqn_forward.1} parent=1 // pred_region
      _
    $region9: #{dqn_forward.1} parent=1 // pred_fallthru
      _
    // Predicated region
    $region10: #{dqn_forward.1} parent=1 // pred_check
      _
    $region11: #{dqn_forward.1} parent=1 // pred_check_branch
      %16 = sbr.rel (0) target = $region13
    $region12: #{dqn_forward.1} parent=1 // pred_region
      _
    $region13: #{dqn_forward.1} parent=1 // pred_fallthru
      _
    // Predicated region
    $region14: #{dqn_forward.1} parent=1 // pred_check
      _
    $region15: #{dqn_forward.1} parent=1 // pred_check_branch
      %18 = sbr.rel (0) target = $region17
    $region16: #{dqn_forward.1} parent=1 // pred_region
      %s20 = ssub.s32 2048, 2048
      %21 = vsyncadd [#allocation3], %s20
      %s22 = sshll.u32 [#allocation2], 4
      %s23 = int_to_ptr.vmem [resolvable:$true] %s22
      %28 = dma.hbm_to_vmem [thread:$0]  %s3, 2048, %s23, [#allocation3], 128, 128, 8
    $region17: #{dqn_forward.1} parent=1 // pred_fallthru
      _
    // Predicated region
    $region18: #{dqn_forward.1} parent=1 // pred_check
      _
    $region19: #{dqn_forward.1} parent=1 // pred_check_branch
      %30 = sbr.rel (0) target = $region21
    $region20: #{dqn_forward.1} parent=1 // pred_region
      _
    $region21: #{dqn_forward.1} parent=1 // pred_fallthru
      _
    // Predicated region
    $region22: #{dqn_forward.1} parent=1 // pred_check
      _
    $region23: #{dqn_forward.1} parent=1 // pred_check_branch
      %32 = sbr.rel (0) target = $region25
    $region24: #{dqn_forward.1} parent=1 // pred_region
      %33 = dma.done [#allocation3], 2048
    $region25: #{dqn_forward.1} parent=1 // pred_fallthru
      _
    %v34 = vld [vmem:[%s0] sm:$0xff]
    %v35 = vld [vmem:[%s0 + $0x8] sm:$0xff]
    %v36 = vld [vmem:[%s0 + $0x10] sm:$0xff]
    %v37 = vld [vmem:[%s0 + $0x18] sm:$0xff]
    %v38 = vld [vmem:[%s0 + $0x20] sm:$0xff]
    %v39 = vld [vmem:[%s0 + $0x28] sm:$0xff]
    %v40 = vld [vmem:[%s0 + $0x30] sm:$0xff]
    %v41 = vld [vmem:[%s0 + $0x38] sm:$0xff]
    %v42 = vld [vmem:[%s1] sm:$0x3]
    %v43 = vld [vmem:[%s2] sm:$0x1]
    %v45 = vlaneseq
    %v46 = vshrl.u32 %v45, 7
    %v47 = vsub.s32 0, %v46
    %v48 = vrot.slane %v43, %v47
    %vm50 = vcmask 15360
    %v52 = vsel %vm50, %v34, 0
    %v55 = vsel %vm50, %v35, 0
    %v58 = vsel %vm50, %v36, 0
    %v61 = vsel %vm50, %v37, 0
    %v64 = vsel %vm50, %v38, 0
    %v67 = vsel %vm50, %v39, 0
    %v70 = vsel %vm50, %v40, 0
    %v73 = vsel %vm50, %v41, 0
    %vm75 = vcmask 1041408
    %v77 = vsel %vm75, %v42, 0
    %79 = vmatprep.subr.mxu0 0.0
    %80 = vmatpush1.msra.mxu0 0.0
    %81 = vmatprep.subr.mxu0 0.0
    %82 = vmatpush1.msra.mxu0 0.0
    %83 = vmatprep.subr.mxu0 0.0
    %84 = vmatpush1.msra.mxu0 0.0
    %85 = vmatprep.subr.mxu0 0.0
    %86 = vmatpush1.msra.mxu0 0.0
    %87 = vmatprep.subr.mxu0 0.0
    %88 = vmatpush1.msra.mxu0 0.0
    %89 = vmatprep.subr.mxu0 0.0
    %90 = vmatpush1.msra.mxu0 0.0
    %91 = vmatprep.subr.mxu0 0.0
    %92 = vmatpush1.msra.mxu0 0.0
    %93 = vmatprep.subr.mxu0 0.0
    %94 = vmatpush1.msra.mxu0 0.0
    %95 = vmatprep.subr.mxu0 0.0
    %96 = vmatpush1.msra.mxu0 0.0
    %97 = vmatprep.subr.mxu0 0.0
    %98 = vmatpush1.msra.mxu0 0.0
    %99 = vmatprep.subr.mxu0 0.0
    %100 = vmatpush1.msra.mxu0 0.0
    %101 = vmatprep.subr.mxu0 0.0
    %102 = vmatpush1.msra.mxu0 0.0
    %103 = vmatprep.subr.mxu0 0.0
    %104 = vmatpush1.msra.mxu0 0.0
    %105 = vmatprep.subr.mxu0 0.0
    %106 = vmatpush1.msra.mxu0 0.0
    %107 = vmatprep.subr.mxu0 0.0
    %108 = vmatpush1.msra.mxu0 0.0
    %109 = vmatprep.subr.mxu0 0.0
    %110 = vmatpush1.msra.mxu0 %v77
    %111 = vmatprep.subr.mxu0 0.0
    %112 = vmatpush2.msra.mxu0 0.0
    %113 = vmatprep.subr.mxu0 0.0
    %114 = vmatpush2.msra.mxu0 0.0
    %115 = vmatprep.subr.mxu0 0.0
    %116 = vmatpush2.msra.mxu0 0.0
    %117 = vmatprep.subr.mxu0 0.0
    %118 = vmatpush2.msra.mxu0 0.0
    %119 = vmatprep.subr.mxu0 0.0
    %120 = vmatpush2.msra.mxu0 0.0
    %121 = vmatprep.subr.mxu0 0.0
    %122 = vmatpush2.msra.mxu0 0.0
    %123 = vmatprep.subr.mxu0 0.0
    %124 = vmatpush2.msra.mxu0 0.0
    %125 = vmatprep.subr.mxu0 0.0
    %126 = vmatpush2.msra.mxu0 0.0
    %127 = vmatprep.subr.mxu0 0.0
    %128 = vmatpush2.msra.mxu0 0.0
    %129 = vmatprep.subr.mxu0 0.0
    %130 = vmatpush2.msra.mxu0 0.0
    %131 = vmatprep.subr.mxu0 0.0
    %132 = vmatpush2.msra.mxu0 0.0
    %133 = vmatprep.subr.mxu0 0.0
    %134 = vmatpush2.msra.mxu0 0.0
    %135 = vmatprep.subr.mxu0 0.0
    %136 = vmatpush2.msra.mxu0 0.0
    %137 = vmatprep.subr.mxu0 0.0
    %138 = vmatpush2.msra.mxu0 0.0
    %139 = vmatprep.subr.mxu0 0.0
    %140 = vmatpush2.msra.mxu0 0.0
    %141 = vmatprep.subr.mxu0 0.0
    %142 = vmatpush2.msra.mxu0 0.0
    %143 = vmatprep.mubr.f32.mxu0 0.0
    %144 = vmatmul.mubr.f32.gmra.mxu0 %v52
    %v145 = vpop.f32.mrf.mxu0
    %v146 = vadd.f32 %v48, %v145
    %v147 = vpop.f32.mrf.mxu0
    %148 = vmatprep.mubr.f32.mxu0 0.0
    %149 = vmatmul.mubr.f32.gmra.mxu0 %v55
    %v150 = vpop.f32.mrf.mxu0
    %v151 = vadd.f32 %v48, %v150
    %v152 = vpop.f32.mrf.mxu0
    %153 = vmatprep.mubr.f32.mxu0 0.0
    %154 = vmatmul.mubr.f32.gmra.mxu0 %v58
    %v155 = vpop.f32.mrf.mxu0
    %v156 = vadd.f32 %v48, %v155
    %v157 = vpop.f32.mrf.mxu0
    %158 = vmatprep.mubr.f32.mxu0 0.0
    %159 = vmatmul.mubr.f32.gmra.mxu0 %v61
    %v160 = vpop.f32.mrf.mxu0
    %v161 = vadd.f32 %v48, %v160
    %v162 = vpop.f32.mrf.mxu0
    %163 = vmatprep.mubr.f32.mxu0 0.0
    %164 = vmatmul.mubr.f32.gmra.mxu0 %v64
    %v165 = vpop.f32.mrf.mxu0
    %v166 = vadd.f32 %v48, %v165
    %v167 = vpop.f32.mrf.mxu0
    %168 = vmatprep.mubr.f32.mxu0 0.0
    %169 = vmatmul.mubr.f32.gmra.mxu0 %v67
    %v170 = vpop.f32.mrf.mxu0
    %v171 = vadd.f32 %v48, %v170
    %v172 = vpop.f32.mrf.mxu0
    %173 = vmatprep.mubr.f32.mxu0 0.0
    %174 = vmatmul.mubr.f32.gmra.mxu0 %v70
    %v175 = vpop.f32.mrf.mxu0
    %v176 = vadd.f32 %v48, %v175
    %v177 = vpop.f32.mrf.mxu0
    %178 = vmatprep.mubr.f32.mxu0 0.0
    %179 = vmatmul.mubr.f32.gmra.mxu0 %v73
    %v180 = vpop.f32.mrf.mxu0
    %v181 = vadd.f32 %v48, %v180
    %v182 = vpop.f32.mrf.mxu0
    %183 = vdwg.mxu0
    %v184 = vmax.f32 %v146, 0.0
    %v185 = vmax.f32 %v151, 0.0
    %v186 = vmax.f32 %v156, 0.0
    %v187 = vmax.f32 %v161, 0.0
    %v188 = vmax.f32 %v166, 0.0
    %v189 = vmax.f32 %v171, 0.0
    %v190 = vmax.f32 %v176, 0.0
    %v191 = vmax.f32 %v181, 0.0
    %v192 = vld [vmem:[#allocation2] sm:$0xff]
    %v193 = vld [vmem:[#allocation2 + $0x8] sm:$0xff]
    %v194 = vld [vmem:[#allocation2 + $0x10] sm:$0xff]
    %v195 = vld [vmem:[#allocation2 + $0x18] sm:$0xff]
    %v196 = vld [vmem:[#allocation2 + $0x20] sm:$0xff]
    %v197 = vld [vmem:[#allocation2 + $0x28] sm:$0xff]
    %v198 = vld [vmem:[#allocation2 + $0x30] sm:$0xff]
    %v199 = vld [vmem:[#allocation2 + $0x38] sm:$0xff]
    %v200 = vld [vmem:[#allocation2 + $0x40] sm:$0xff]
    %v201 = vld [vmem:[#allocation2 + $0x48] sm:$0xff]
    %v202 = vld [vmem:[#allocation2 + $0x50] sm:$0xff]
    %v203 = vld [vmem:[#allocation2 + $0x58] sm:$0xff]
    %v204 = vld [vmem:[#allocation2 + $0x60] sm:$0xff]
    %v205 = vld [vmem:[#allocation2 + $0x68] sm:$0xff]
    %v206 = vld [vmem:[#allocation2 + $0x70] sm:$0xff]
    %v207 = vld [vmem:[#allocation2 + $0x78] sm:$0xff]
    %v208 = vld [vmem:[%s4] sm:$0x1]
    %v210 = vlaneseq
    %v211 = vshrl.u32 %v210, 7
    %v212 = vsub.s32 0, %v211
    %v213 = vrot.slane %v208, %v212
    %215 = vmatprep.subr.mxu0 0.0
    %216 = vmatpush1.msra.mxu0 %v207
    %217 = vmatprep.subr.mxu0 0.0
    %218 = vmatpush1.msra.mxu0 %v206
    %219 = vmatprep.subr.mxu0 0.0
    %220 = vmatpush1.msra.mxu0 %v205
    %221 = vmatprep.subr.mxu0 0.0
    %222 = vmatpush1.msra.mxu0 %v204
    %223 = vmatprep.subr.mxu0 0.0
    %224 = vmatpush1.msra.mxu0 %v203
    %225 = vmatprep.subr.mxu0 0.0
    %226 = vmatpush1.msra.mxu0 %v202
    %227 = vmatprep.subr.mxu0 0.0
    %228 = vmatpush1.msra.mxu0 %v201
    %229 = vmatprep.subr.mxu0 0.0
    %230 = vmatpush1.msra.mxu0 %v200
    %231 = vmatprep.subr.mxu0 0.0
    %232 = vmatpush1.msra.mxu0 %v199
    %233 = vmatprep.subr.mxu0 0.0
    %234 = vmatpush1.msra.mxu0 %v198
    %235 = vmatprep.subr.mxu0 0.0
    %236 = vmatpush1.msra.mxu0 %v197
    %237 = vmatprep.subr.mxu0 0.0
    %238 = vmatpush1.msra.mxu0 %v196
    %239 = vmatprep.subr.mxu0 0.0
    %240 = vmatpush1.msra.mxu0 %v195
    %241 = vmatprep.subr.mxu0 0.0
    %242 = vmatpush1.msra.mxu0 %v194
    %243 = vmatprep.subr.mxu0 0.0
    %244 = vmatpush1.msra.mxu0 %v193
    %245 = vmatprep.subr.mxu0 0.0
    %246 = vmatpush1.msra.mxu0 %v192
    %247 = vmatprep.subr.mxu0 0.0
    %248 = vmatpush2.msra.mxu0 0.0
    %249 = vmatprep.subr.mxu0 0.0
    %250 = vmatpush2.msra.mxu0 0.0
    %251 = vmatprep.subr.mxu0 0.0
    %252 = vmatpush2.msra.mxu0 0.0
    %253 = vmatprep.subr.mxu0 0.0
    %254 = vmatpush2.msra.mxu0 0.0
    %255 = vmatprep.subr.mxu0 0.0
    %256 = vmatpush2.msra.mxu0 0.0
    %257 = vmatprep.subr.mxu0 0.0
    %258 = vmatpush2.msra.mxu0 0.0
    %259 = vmatprep.subr.mxu0 0.0
    %260 = vmatpush2.msra.mxu0 0.0
    %261 = vmatprep.subr.mxu0 0.0
    %262 = vmatpush2.msra.mxu0 0.0
    %263 = vmatprep.subr.mxu0 0.0
    %264 = vmatpush2.msra.mxu0 0.0
    %265 = vmatprep.subr.mxu0 0.0
    %266 = vmatpush2.msra.mxu0 0.0
    %267 = vmatprep.subr.mxu0 0.0
    %268 = vmatpush2.msra.mxu0 0.0
    %269 = vmatprep.subr.mxu0 0.0
    %270 = vmatpush2.msra.mxu0 0.0
    %271 = vmatprep.subr.mxu0 0.0
    %272 = vmatpush2.msra.mxu0 0.0
    %273 = vmatprep.subr.mxu0 0.0
    %274 = vmatpush2.msra.mxu0 0.0
    %275 = vmatprep.subr.mxu0 0.0
    %276 = vmatpush2.msra.mxu0 0.0
    %277 = vmatprep.subr.mxu0 0.0
    %278 = vmatpush2.msra.mxu0 0.0
    %279 = vmatprep.mubr.f32.mxu0 0.0
    %280 = vmatmul.mubr.f32.gmra.mxu0 %v184
    %v281 = vpop.f32.mrf.mxu0
    %v282 = vadd.f32 %v213, %v281
    %v283 = vpop.f32.mrf.mxu0
    %284 = vmatprep.mubr.f32.mxu0 0.0
    %285 = vmatmul.mubr.f32.gmra.mxu0 %v185
    %v286 = vpop.f32.mrf.mxu0
    %v287 = vadd.f32 %v213, %v286
    %v288 = vpop.f32.mrf.mxu0
    %289 = vmatprep.mubr.f32.mxu0 0.0
    %290 = vmatmul.mubr.f32.gmra.mxu0 %v186
    %v291 = vpop.f32.mrf.mxu0
    %v292 = vadd.f32 %v213, %v291
    %v293 = vpop.f32.mrf.mxu0
    %294 = vmatprep.mubr.f32.mxu0 0.0
    %295 = vmatmul.mubr.f32.gmra.mxu0 %v187
    %v296 = vpop.f32.mrf.mxu0
    %v297 = vadd.f32 %v213, %v296
    %v298 = vpop.f32.mrf.mxu0
    %299 = vmatprep.mubr.f32.mxu0 0.0
    %300 = vmatmul.mubr.f32.gmra.mxu0 %v188
    %v301 = vpop.f32.mrf.mxu0
    %v302 = vadd.f32 %v213, %v301
    %v303 = vpop.f32.mrf.mxu0
    %304 = vmatprep.mubr.f32.mxu0 0.0
    %305 = vmatmul.mubr.f32.gmra.mxu0 %v189
    %v306 = vpop.f32.mrf.mxu0
    %v307 = vadd.f32 %v213, %v306
    %v308 = vpop.f32.mrf.mxu0
    %309 = vmatprep.mubr.f32.mxu0 0.0
    %310 = vmatmul.mubr.f32.gmra.mxu0 %v190
    %v311 = vpop.f32.mrf.mxu0
    %v312 = vadd.f32 %v213, %v311
    %v313 = vpop.f32.mrf.mxu0
    %314 = vmatprep.mubr.f32.mxu0 0.0
    %315 = vmatmul.mubr.f32.gmra.mxu0 %v191
    %v316 = vpop.f32.mrf.mxu0
    %v317 = vadd.f32 %v213, %v316
    %v318 = vpop.f32.mrf.mxu0
    %319 = vdwg.mxu0
    %320 = vst [vmem:[%s5] sm:$0xff] %v282
    %321 = vst [vmem:[%s5 + $0x8] sm:$0xff] %v287
    %322 = vst [vmem:[%s5 + $0x10] sm:$0xff] %v292
    %323 = vst [vmem:[%s5 + $0x18] sm:$0xff] %v297
    %324 = vst [vmem:[%s5 + $0x20] sm:$0xff] %v302
    %325 = vst [vmem:[%s5 + $0x28] sm:$0xff] %v307
    %326 = vst [vmem:[%s5 + $0x30] sm:$0xff] %v312
    %327 = vst [vmem:[%s5 + $0x38] sm:$0xff] %v317
    // Predicated region
    $region26: #{dqn_forward.1} parent=1 // pred_check
      _
    $region27: #{dqn_forward.1} parent=1 // pred_check_branch
      %329 = sbr.rel (0) target = $region29
    $region28: #{dqn_forward.1} parent=1 // pred_region
      _
    $region29: #{dqn_forward.1} parent=1 // pred_fallthru
      _
    // Predicated region
    $region30: #{dqn_forward.1} parent=1 // pred_check
      _
    $region31: #{dqn_forward.1} parent=1 // pred_check_branch
      %331 = sbr.rel (0) target = $region33
    $region32: #{dqn_forward.1} parent=1 // pred_region
      _
    $region33: #{dqn_forward.1} parent=1 // pred_fallthru
      _
    %332 = vsyncpa [#allocation3], 1

</llo_original>
